<compile_context>
chip_gen: v6e
topology: v6e:2x2x1
jax: 0.10.0
libtpu: 0.0.40
codegen_flags: <defaults>
</compile_context>

<pallas_src>
import jax
import jax.numpy as jnp
import numpy as np
from jax.experimental import pallas as pl
from jax.experimental.pallas import tpu as pltpu

HIDDEN = 32


def _lstm_kernel(x_ref, wih_ref, whh_ref, b_ref, w3_ref, b3_ref, w4_ref, b4_ref,
                 out_ref):
    """Whole LSTM sequence + MLP head, one invocation per batch tile.

    x_ref   : (T*Bt, 1) input, time-major with batch innermost
    wih_ref : (1, 4H)   W_ih^T  (input_size=1)
    whh_ref : (H, 4H)   W_hh^T
    b_ref   : (1, 4H)   b_ih + b_hh
    w3_ref  : (H, H)    fc3 weight^T
    b3_ref  : (1, H)    fc3 bias
    w4_ref  : (1, H)    fc4 weight (row vector)
    b4_ref  : (1, 1)    fc4 bias
    out_ref : (Bt, 1)   sigmoid(fc4(relu(fc3(h_T))))
    """
    H = HIDDEN
    Bt = out_ref.shape[0]
    T = x_ref.shape[0] // Bt

    wih = wih_ref[...]          # (1, 4H)
    whh = whh_ref[...]          # (H, 4H), resident across the unrolled loop
    b = b_ref[...]              # (1, 4H)

    # Input projection for all T steps at once, off the serial h->gates->h
    # chain: a single lane-broadcast of the (T*Bt, 1) column against W_ih^T.
    gx_all = x_ref[...] * wih + b                      # (T*Bt, 4H)

    # Hoisted constant lane scale: double the g-gate lanes so a single sigmoid
    # pass yields i/f/o directly and tanh(g) via tanh(x) = 2*sigmoid(2x) - 1.
    lane = jax.lax.broadcasted_iota(jnp.int32, (1, 4 * H), 1)
    gate_scale = jnp.where((lane >= 2 * H) & (lane < 3 * H), 2.0, 1.0)

    h = jnp.zeros((Bt, H), jnp.float32)
    c = jnp.zeros((Bt, H), jnp.float32)

    # T is small & static -> fully unrolled recurrence: no grid steps, no
    # per-step DMA, full scheduler visibility across time steps.
    # TODO(synk): if T or Bt grows, switch to lax.fori_loop with gx_all staged
    # in VMEM scratch to bound live vregs; at T=8, Bt=2 everything fits.
    for t in range(T):
        gx = gx_all[t * Bt:(t + 1) * Bt, :]            # cheap sublane slice
        gates = gx + jnp.dot(h, whh, preferred_element_type=jnp.float32)
        sg = jax.nn.sigmoid(gates * gate_scale)        # single EUP pass / step
        # PyTorch gate order: input, forget, cell(g), output
        i_g = sg[:, 0:H]
        f_g = sg[:, H:2 * H]
        g_g = 2.0 * sg[:, 2 * H:3 * H] - 1.0           # == tanh(g), VPU fix-up
        o_g = sg[:, 3 * H:4 * H]
        c = f_g * c + i_g * g_g
        h = o_g * jnp.tanh(c)

    hid = jnp.maximum(
        jnp.dot(h, w3_ref[...], preferred_element_type=jnp.float32) + b3_ref[...],
        0.0)
    # fc4 (32 -> 1): VPU multiply + lane reduce instead of a 1-column MXU matmul.
    logit = jnp.sum(hid * w4_ref[...], axis=-1, keepdims=True) + b4_ref[...]
    out_ref[...] = jax.nn.sigmoid(logit)


@jax.jit
def lstm_forward(x, params):
    """x: (B, T, 1) float32 (PyTorch batch_first). Returns (B, 1) float32."""
    wih_t, whh_t, b, w3_t, b3, w4, b4 = params
    B, T, _ = x.shape
    H = HIDDEN

    # Batch tiling: one full-array tile for small B; fixed 8-aligned tiles for
    # large B so the "parallel" grid axis can split across TensorCores (v7x).
    b_tile = B if B <= 128 else 128
    n_tiles = int(pl.cdiv(B, b_tile))
    B_pad = n_tiles * b_tile

    x2 = x[:, :, 0]                                    # (B, T)
    if B_pad != B:
        x2 = jnp.pad(x2, ((0, B_pad - B), (0, 0)))
    # Time-major with batch innermost so in-kernel per-step slices are sublane
    # slices: row (i*T*b_tile + t*b_tile + j) holds x[i*b_tile + j, t].
    x_tm = (x2.reshape(n_tiles, b_tile, T)
              .transpose(0, 2, 1)
              .reshape(n_tiles * T * b_tile, 1))

    const = lambda i: (0, 0)

    out = pl.pallas_call(
        _lstm_kernel,
        out_shape=jax.ShapeDtypeStruct((B_pad, 1), jnp.float32),
        grid_spec=pltpu.PrefetchScalarGridSpec(
            num_scalar_prefetch=0,
            grid=(n_tiles,),
            in_specs=[
                pl.BlockSpec((T * b_tile, 1), lambda i: (i, 0)),  # x time-major
                pl.BlockSpec((1, 4 * H), const),                  # W_ih^T
                pl.BlockSpec((H, 4 * H), const),                  # W_hh^T
                pl.BlockSpec((1, 4 * H), const),                  # b_ih + b_hh
                pl.BlockSpec((H, H), const),                      # fc3 W^T
                pl.BlockSpec((1, H), const),                      # fc3 b
                pl.BlockSpec((1, H), const),                      # fc4 W (row)
                pl.BlockSpec((1, 1), const),                      # fc4 b
            ],
            out_specs=pl.BlockSpec((b_tile, 1), lambda i: (i, 0)),
        ),
        compiler_params=pltpu.CompilerParams(
            dimension_semantics=("parallel",)),
    )(x_tm, wih_t, whh_t, b, w3_t, b3, w4, b4)
    return out[:B]


def init_params(key):
    """Deterministic synthetic init matching PyTorch module shapes."""
    H = HIDDEN
    ks = jax.random.split(key, 8)
    s = 1.0 / np.sqrt(H)
    u = lambda k, shape: jax.random.uniform(k, shape, jnp.float32, -s, s)
    w_ih = u(ks[0], (4 * H, 1))      # torch weight_ih_l0
    w_hh = u(ks[1], (4 * H, H))      # torch weight_hh_l0
    b_ih = u(ks[2], (4 * H,))
    b_hh = u(ks[3], (4 * H,))
    w3 = u(ks[4], (H, H))            # fc3.weight
    b3 = u(ks[5], (H,))
    w4 = u(ks[6], (1, H))            # fc4.weight
    b4 = u(ks[7], (1,))
    return (
        w_ih.T,                       # (1, 4H)
        w_hh.T,                       # (H, 4H)
        (b_ih + b_hh).reshape(1, 4 * H),
        w3.T,                         # (H, H)
        b3.reshape(1, H),
        w4,                           # (1, H)
        b4.reshape(1, 1),
    )


def ref_forward(x, params):
    """Pure-JAX reference of the PyTorch forward, for correctness check."""
    wih_t, whh_t, b, w3_t, b3, w4, b4 = params
    B, T, _ = x.shape
    H = HIDDEN
    h = jnp.zeros((B, H), jnp.float32)
    c = jnp.zeros((B, H), jnp.float32)
    for t in range(T):
        gates = x[:, t, :] @ wih_t + h @ whh_t + b
        i_g = jax.nn.sigmoid(gates[:, 0:H])
        f_g = jax.nn.sigmoid(gates[:, H:2 * H])
        g_g = jnp.tanh(gates[:, 2 * H:3 * H])
        o_g = jax.nn.sigmoid(gates[:, 3 * H:4 * H])
        c = f_g * c + i_g * g_g
        h = o_g * jnp.tanh(c)
    hid = jnp.maximum(h @ w3_t + b3, 0.0)
    return jax.nn.sigmoid(hid @ w4.T + b4)


if __name__ == "__main__":
    key = jax.random.PRNGKey(0)
    k_x, k_p = jax.random.split(key)

    B, T = 2, 8
    x = jax.random.normal(k_x, (B, T, 1), dtype=jnp.float32)
    params = init_params(k_p)

    out = lstm_forward(x, params)
    jax.block_until_ready(out)

    ref = ref_forward(x, params)
    np.testing.assert_allclose(np.asarray(out), np.asarray(ref), rtol=1e-4, atol=1e-5)
    assert out.shape == (B, 1)

    print("KERNEL_OK")
</pallas_src>

<mosaic_0001>
module attributes {stable_mosaic.version = 11 : i64} {
  func.func @_lstm_kernel(%arg0: i32, %arg1: memref<16x1xf32, #tpu.memory_space<vmem>>, %arg2: memref<1x128xf32, #tpu.memory_space<vmem>>, %arg3: memref<32x128xf32, #tpu.memory_space<vmem>>, %arg4: memref<1x128xf32, #tpu.memory_space<vmem>>, %arg5: memref<32x32xf32, #tpu.memory_space<vmem>>, %arg6: memref<1x32xf32, #tpu.memory_space<vmem>>, %arg7: memref<1x32xf32, #tpu.memory_space<vmem>>, %arg8: memref<1x1xf32, #tpu.memory_space<vmem>>, %arg9: memref<2x1xf32, #tpu.memory_space<vmem>>) attributes {dimension_semantics = [#tpu.dimension_semantics<parallel>], iteration_bounds = array<i64: 1>, scalar_prefetch = 0 : i64, scratch_operands = 0 : i64, tpu.core_type = #tpu.core_type<tc>, window_params = [{transform_indices = @transform_0, window_bounds = array<i64: 16, 1>}, {pipeline_mode = #tpu.pipeline_mode<synchronous>, transform_indices = @transform_1, window_bounds = array<i64: 1, 128>}, {pipeline_mode = #tpu.pipeline_mode<synchronous>, transform_indices = @transform_2, window_bounds = array<i64: 32, 128>}, {pipeline_mode = #tpu.pipeline_mode<synchronous>, transform_indices = @transform_3, window_bounds = array<i64: 1, 128>}, {pipeline_mode = #tpu.pipeline_mode<synchronous>, transform_indices = @transform_4, window_bounds = array<i64: 32, 32>}, {pipeline_mode = #tpu.pipeline_mode<synchronous>, transform_indices = @transform_5, window_bounds = array<i64: 1, 32>}, {pipeline_mode = #tpu.pipeline_mode<synchronous>, transform_indices = @transform_6, window_bounds = array<i64: 1, 32>}, {pipeline_mode = #tpu.pipeline_mode<synchronous>, transform_indices = @transform_7, window_bounds = array<i64: 1, 1>}, {transform_indices = @transform_8, window_bounds = array<i64: 2, 1>}]} {
    %c0 = arith.constant 0 : index
    %c0_0 = arith.constant 0 : index
    %0 = vector.load %arg2[%c0, %c0_0] : memref<1x128xf32, #tpu.memory_space<vmem>>, vector<1x128xf32>
    %c0_1 = arith.constant 0 : index
    %c0_2 = arith.constant 0 : index
    %1 = vector.load %arg3[%c0_1, %c0_2] : memref<32x128xf32, #tpu.memory_space<vmem>>, vector<32x128xf32>
    %c0_3 = arith.constant 0 : index
    %c0_4 = arith.constant 0 : index
    %2 = vector.load %arg4[%c0_3, %c0_4] : memref<1x128xf32, #tpu.memory_space<vmem>>, vector<1x128xf32>
    %c0_5 = arith.constant 0 : index
    %c0_6 = arith.constant 0 : index
    %3 = vector.load %arg1[%c0_5, %c0_6] : memref<16x1xf32, #tpu.memory_space<vmem>>, vector<16x1xf32>
    %4 = vector.broadcast %3 : vector<16x1xf32> to vector<16x128xf32>
    %5 = vector.broadcast %0 : vector<1x128xf32> to vector<16x128xf32>
    %6 = arith.mulf %4, %5 : vector<16x128xf32>
    %7 = vector.broadcast %2 : vector<1x128xf32> to vector<16x128xf32>
    %8 = arith.addf %6, %7 : vector<16x128xf32>
    %9 = tpu.iota {dimensions = array<i32: 1>} : vector<1x128xi32>
    %c64_i32 = arith.constant 64 : i32
    %10 = vector.broadcast %c64_i32 : i32 to vector<1x128xi32>
    %11 = arith.cmpi sge, %9, %10 : vector<1x128xi32>
    %c96_i32 = arith.constant 96 : i32
    %12 = vector.broadcast %c96_i32 : i32 to vector<1x128xi32>
    %13 = arith.cmpi slt, %9, %12 : vector<1x128xi32>
    %14 = arith.andi %11, %13 : vector<1x128xi1>
    %cst = arith.constant 2.000000e+00 : f32
    %cst_7 = arith.constant 1.000000e+00 : f32
    %15 = vector.broadcast %cst : f32 to vector<1x128xf32>
    %16 = vector.broadcast %cst_7 : f32 to vector<1x128xf32>
    %17 = arith.select %14, %15, %16 : vector<1x128xi1>, vector<1x128xf32>
    %cst_8 = arith.constant 0.000000e+00 : f32
    %18 = vector.broadcast %cst_8 : f32 to vector<2x32xf32>
    %cst_9 = arith.constant 0.000000e+00 : f32
    %19 = vector.broadcast %cst_9 : f32 to vector<2x32xf32>
    %20 = vector.extract_strided_slice %8 {offsets = [0, 0], sizes = [2, 128], strides = [1, 1]} : vector<16x128xf32> to vector<2x128xf32>
    %cst_10 = arith.constant dense<0.000000e+00> : vector<2x128xf32>
    %21 = tpu.matmul %18, %1, %cst_10 {dimension_numbers = #tpu.dot_dimension_numbers<[1], [0], [0], [1], [0, 0, 1, 1], [], []>} : vector<2x32xf32>, vector<32x128xf32>, vector<2x128xf32> -> vector<2x128xf32>
    %22 = arith.addf %20, %21 : vector<2x128xf32>
    %23 = vector.broadcast %17 : vector<1x128xf32> to vector<2x128xf32>
    %24 = arith.mulf %22, %23 : vector<2x128xf32>
    %25 = arith.negf %24 : vector<2x128xf32>
    %26 = math.exp %25 : vector<2x128xf32>
    %cst_11 = arith.constant 1.000000e+00 : f32
    %27 = vector.broadcast %cst_11 : f32 to vector<2x128xf32>
    %28 = arith.addf %27, %26 : vector<2x128xf32>
    %29 = arith.divf %27, %28 : vector<2x128xf32>
    %30 = vector.extract_strided_slice %29 {offsets = [0, 0], sizes = [2, 32], strides = [1, 1]} : vector<2x128xf32> to vector<2x32xf32>
    %31 = vector.extract_strided_slice %29 {offsets = [0, 32], sizes = [2, 32], strides = [1, 1]} : vector<2x128xf32> to vector<2x32xf32>
    %32 = vector.extract_strided_slice %29 {offsets = [0, 64], sizes = [2, 32], strides = [1, 1]} : vector<2x128xf32> to vector<2x32xf32>
    %cst_12 = arith.constant 2.000000e+00 : f32
    %33 = vector.broadcast %cst_12 : f32 to vector<2x32xf32>
    %34 = arith.mulf %33, %32 : vector<2x32xf32>
    %cst_13 = arith.constant 1.000000e+00 : f32
    %35 = vector.broadcast %cst_13 : f32 to vector<2x32xf32>
    %36 = arith.subf %34, %35 : vector<2x32xf32>
    %37 = vector.extract_strided_slice %29 {offsets = [0, 96], sizes = [2, 32], strides = [1, 1]} : vector<2x128xf32> to vector<2x32xf32>
    %38 = arith.mulf %31, %19 : vector<2x32xf32>
    %39 = arith.mulf %30, %36 : vector<2x32xf32>
    %40 = arith.addf %38, %39 : vector<2x32xf32>
    %41 = math.tanh %40 : vector<2x32xf32>
    %42 = arith.mulf %37, %41 : vector<2x32xf32>
    %43 = vector.extract_strided_slice %8 {offsets = [2, 0], sizes = [2, 128], strides = [1, 1]} : vector<16x128xf32> to vector<2x128xf32>
    %cst_14 = arith.constant dense<0.000000e+00> : vector<2x128xf32>
    %44 = tpu.matmul %42, %1, %cst_14 {dimension_numbers = #tpu.dot_dimension_numbers<[1], [0], [0], [1], [0, 0, 1, 1], [], []>} : vector<2x32xf32>, vector<32x128xf32>, vector<2x128xf32> -> vector<2x128xf32>
    %45 = arith.addf %43, %44 : vector<2x128xf32>
    %46 = vector.broadcast %17 : vector<1x128xf32> to vector<2x128xf32>
    %47 = arith.mulf %45, %46 : vector<2x128xf32>
    %48 = arith.negf %47 : vector<2x128xf32>
    %49 = math.exp %48 : vector<2x128xf32>
    %cst_15 = arith.constant 1.000000e+00 : f32
    %50 = vector.broadcast %cst_15 : f32 to vector<2x128xf32>
    %51 = arith.addf %50, %49 : vector<2x128xf32>
    %52 = arith.divf %50, %51 : vector<2x128xf32>
    %53 = vector.extract_strided_slice %52 {offsets = [0, 0], sizes = [2, 32], strides = [1, 1]} : vector<2x128xf32> to vector<2x32xf32>
    %54 = vector.extract_strided_slice %52 {offsets = [0, 32], sizes = [2, 32], strides = [1, 1]} : vector<2x128xf32> to vector<2x32xf32>
    %55 = vector.extract_strided_slice %52 {offsets = [0, 64], sizes = [2, 32], strides = [1, 1]} : vector<2x128xf32> to vector<2x32xf32>
    %cst_16 = arith.constant 2.000000e+00 : f32
    %56 = vector.broadcast %cst_16 : f32 to vector<2x32xf32>
    %57 = arith.mulf %56, %55 : vector<2x32xf32>
    %cst_17 = arith.constant 1.000000e+00 : f32
    %58 = vector.broadcast %cst_17 : f32 to vector<2x32xf32>
    %59 = arith.subf %57, %58 : vector<2x32xf32>
    %60 = vector.extract_strided_slice %52 {offsets = [0, 96], sizes = [2, 32], strides = [1, 1]} : vector<2x128xf32> to vector<2x32xf32>
    %61 = arith.mulf %54, %40 : vector<2x32xf32>
    %62 = arith.mulf %53, %59 : vector<2x32xf32>
    %63 = arith.addf %61, %62 : vector<2x32xf32>
    %64 = math.tanh %63 : vector<2x32xf32>
    %65 = arith.mulf %60, %64 : vector<2x32xf32>
    %66 = vector.extract_strided_slice %8 {offsets = [4, 0], sizes = [2, 128], strides = [1, 1]} : vector<16x128xf32> to vector<2x128xf32>
    %cst_18 = arith.constant dense<0.000000e+00> : vector<2x128xf32>
    %67 = tpu.matmul %65, %1, %cst_18 {dimension_numbers = #tpu.dot_dimension_numbers<[1], [0], [0], [1], [0, 0, 1, 1], [], []>} : vector<2x32xf32>, vector<32x128xf32>, vector<2x128xf32> -> vector<2x128xf32>
    %68 = arith.addf %66, %67 : vector<2x128xf32>
    %69 = vector.broadcast %17 : vector<1x128xf32> to vector<2x128xf32>
    %70 = arith.mulf %68, %69 : vector<2x128xf32>
    %71 = arith.negf %70 : vector<2x128xf32>
    %72 = math.exp %71 : vector<2x128xf32>
    %cst_19 = arith.constant 1.000000e+00 : f32
    %73 = vector.broadcast %cst_19 : f32 to vector<2x128xf32>
    %74 = arith.addf %73, %72 : vector<2x128xf32>
    %75 = arith.divf %73, %74 : vector<2x128xf32>
    %76 = vector.extract_strided_slice %75 {offsets = [0, 0], sizes = [2, 32], strides = [1, 1]} : vector<2x128xf32> to vector<2x32xf32>
    %77 = vector.extract_strided_slice %75 {offsets = [0, 32], sizes = [2, 32], strides = [1, 1]} : vector<2x128xf32> to vector<2x32xf32>
    %78 = vector.extract_strided_slice %75 {offsets = [0, 64], sizes = [2, 32], strides = [1, 1]} : vector<2x128xf32> to vector<2x32xf32>
    %cst_20 = arith.constant 2.000000e+00 : f32
    %79 = vector.broadcast %cst_20 : f32 to vector<2x32xf32>
    %80 = arith.mulf %79, %78 : vector<2x32xf32>
    %cst_21 = arith.constant 1.000000e+00 : f32
    %81 = vector.broadcast %cst_21 : f32 to vector<2x32xf32>
    %82 = arith.subf %80, %81 : vector<2x32xf32>
    %83 = vector.extract_strided_slice %75 {offsets = [0, 96], sizes = [2, 32], strides = [1, 1]} : vector<2x128xf32> to vector<2x32xf32>
    %84 = arith.mulf %77, %63 : vector<2x32xf32>
    %85 = arith.mulf %76, %82 : vector<2x32xf32>
    %86 = arith.addf %84, %85 : vector<2x32xf32>
    %87 = math.tanh %86 : vector<2x32xf32>
    %88 = arith.mulf %83, %87 : vector<2x32xf32>
    %89 = vector.extract_strided_slice %8 {offsets = [6, 0], sizes = [2, 128], strides = [1, 1]} : vector<16x128xf32> to vector<2x128xf32>
    %cst_22 = arith.constant dense<0.000000e+00> : vector<2x128xf32>
    %90 = tpu.matmul %88, %1, %cst_22 {dimension_numbers = #tpu.dot_dimension_numbers<[1], [0], [0], [1], [0, 0, 1, 1], [], []>} : vector<2x32xf32>, vector<32x128xf32>, vector<2x128xf32> -> vector<2x128xf32>
    %91 = arith.addf %89, %90 : vector<2x128xf32>
    %92 = vector.broadcast %17 : vector<1x128xf32> to vector<2x128xf32>
    %93 = arith.mulf %91, %92 : vector<2x128xf32>
    %94 = arith.negf %93 : vector<2x128xf32>
    %95 = math.exp %94 : vector<2x128xf32>
    %cst_23 = arith.constant 1.000000e+00 : f32
    %96 = vector.broadcast %cst_23 : f32 to vector<2x128xf32>
    %97 = arith.addf %96, %95 : vector<2x128xf32>
    %98 = arith.divf %96, %97 : vector<2x128xf32>
    %99 = vector.extract_strided_slice %98 {offsets = [0, 0], sizes = [2, 32], strides = [1, 1]} : vector<2x128xf32> to vector<2x32xf32>
    %100 = vector.extract_strided_slice %98 {offsets = [0, 32], sizes = [2, 32], strides = [1, 1]} : vector<2x128xf32> to vector<2x32xf32>
    %101 = vector.extract_strided_slice %98 {offsets = [0, 64], sizes = [2, 32], strides = [1, 1]} : vector<2x128xf32> to vector<2x32xf32>
    %cst_24 = arith.constant 2.000000e+00 : f32
    %102 = vector.broadcast %cst_24 : f32 to vector<2x32xf32>
    %103 = arith.mulf %102, %101 : vector<2x32xf32>
    %cst_25 = arith.constant 1.000000e+00 : f32
    %104 = vector.broadcast %cst_25 : f32 to vector<2x32xf32>
    %105 = arith.subf %103, %104 : vector<2x32xf32>
    %106 = vector.extract_strided_slice %98 {offsets = [0, 96], sizes = [2, 32], strides = [1, 1]} : vector<2x128xf32> to vector<2x32xf32>
    %107 = arith.mulf %100, %86 : vector<2x32xf32>
    %108 = arith.mulf %99, %105 : vector<2x32xf32>
    %109 = arith.addf %107, %108 : vector<2x32xf32>
    %110 = math.tanh %109 : vector<2x32xf32>
    %111 = arith.mulf %106, %110 : vector<2x32xf32>
    %112 = vector.extract_strided_slice %8 {offsets = [8, 0], sizes = [2, 128], strides = [1, 1]} : vector<16x128xf32> to vector<2x128xf32>
    %cst_26 = arith.constant dense<0.000000e+00> : vector<2x128xf32>
    %113 = tpu.matmul %111, %1, %cst_26 {dimension_numbers = #tpu.dot_dimension_numbers<[1], [0], [0], [1], [0, 0, 1, 1], [], []>} : vector<2x32xf32>, vector<32x128xf32>, vector<2x128xf32> -> vector<2x128xf32>
    %114 = arith.addf %112, %113 : vector<2x128xf32>
    %115 = vector.broadcast %17 : vector<1x128xf32> to vector<2x128xf32>
    %116 = arith.mulf %114, %115 : vector<2x128xf32>
    %117 = arith.negf %116 : vector<2x128xf32>
    %118 = math.exp %117 : vector<2x128xf32>
    %cst_27 = arith.constant 1.000000e+00 : f32
    %119 = vector.broadcast %cst_27 : f32 to vector<2x128xf32>
    %120 = arith.addf %119, %118 : vector<2x128xf32>
    %121 = arith.divf %119, %120 : vector<2x128xf32>
    %122 = vector.extract_strided_slice %121 {offsets = [0, 0], sizes = [2, 32], strides = [1, 1]} : vector<2x128xf32> to vector<2x32xf32>
    %123 = vector.extract_strided_slice %121 {offsets = [0, 32], sizes = [2, 32], strides = [1, 1]} : vector<2x128xf32> to vector<2x32xf32>
    %124 = vector.extract_strided_slice %121 {offsets = [0, 64], sizes = [2, 32], strides = [1, 1]} : vector<2x128xf32> to vector<2x32xf32>
    %cst_28 = arith.constant 2.000000e+00 : f32
    %125 = vector.broadcast %cst_28 : f32 to vector<2x32xf32>
    %126 = arith.mulf %125, %124 : vector<2x32xf32>
    %cst_29 = arith.constant 1.000000e+00 : f32
    %127 = vector.broadcast %cst_29 : f32 to vector<2x32xf32>
    %128 = arith.subf %126, %127 : vector<2x32xf32>
    %129 = vector.extract_strided_slice %121 {offsets = [0, 96], sizes = [2, 32], strides = [1, 1]} : vector<2x128xf32> to vector<2x32xf32>
    %130 = arith.mulf %123, %109 : vector<2x32xf32>
    %131 = arith.mulf %122, %128 : vector<2x32xf32>
    %132 = arith.addf %130, %131 : vector<2x32xf32>
    %133 = math.tanh %132 : vector<2x32xf32>
    %134 = arith.mulf %129, %133 : vector<2x32xf32>
    %135 = vector.extract_strided_slice %8 {offsets = [10, 0], sizes = [2, 128], strides = [1, 1]} : vector<16x128xf32> to vector<2x128xf32>
    %cst_30 = arith.constant dense<0.000000e+00> : vector<2x128xf32>
    %136 = tpu.matmul %134, %1, %cst_30 {dimension_numbers = #tpu.dot_dimension_numbers<[1], [0], [0], [1], [0, 0, 1, 1], [], []>} : vector<2x32xf32>, vector<32x128xf32>, vector<2x128xf32> -> vector<2x128xf32>
    %137 = arith.addf %135, %136 : vector<2x128xf32>
    %138 = vector.broadcast %17 : vector<1x128xf32> to vector<2x128xf32>
    %139 = arith.mulf %137, %138 : vector<2x128xf32>
    %140 = arith.negf %139 : vector<2x128xf32>
    %141 = math.exp %140 : vector<2x128xf32>
    %cst_31 = arith.constant 1.000000e+00 : f32
    %142 = vector.broadcast %cst_31 : f32 to vector<2x128xf32>
    %143 = arith.addf %142, %141 : vector<2x128xf32>
    %144 = arith.divf %142, %143 : vector<2x128xf32>
    %145 = vector.extract_strided_slice %144 {offsets = [0, 0], sizes = [2, 32], strides = [1, 1]} : vector<2x128xf32> to vector<2x32xf32>
    %146 = vector.extract_strided_slice %144 {offsets = [0, 32], sizes = [2, 32], strides = [1, 1]} : vector<2x128xf32> to vector<2x32xf32>
    %147 = vector.extract_strided_slice %144 {offsets = [0, 64], sizes = [2, 32], strides = [1, 1]} : vector<2x128xf32> to vector<2x32xf32>
    %cst_32 = arith.constant 2.000000e+00 : f32
    %148 = vector.broadcast %cst_32 : f32 to vector<2x32xf32>
    %149 = arith.mulf %148, %147 : vector<2x32xf32>
    %cst_33 = arith.constant 1.000000e+00 : f32
    %150 = vector.broadcast %cst_33 : f32 to vector<2x32xf32>
    %151 = arith.subf %149, %150 : vector<2x32xf32>
    %152 = vector.extract_strided_slice %144 {offsets = [0, 96], sizes = [2, 32], strides = [1, 1]} : vector<2x128xf32> to vector<2x32xf32>
    %153 = arith.mulf %146, %132 : vector<2x32xf32>
    %154 = arith.mulf %145, %151 : vector<2x32xf32>
    %155 = arith.addf %153, %154 : vector<2x32xf32>
    %156 = math.tanh %155 : vector<2x32xf32>
    %157 = arith.mulf %152, %156 : vector<2x32xf32>
    %158 = vector.extract_strided_slice %8 {offsets = [12, 0], sizes = [2, 128], strides = [1, 1]} : vector<16x128xf32> to vector<2x128xf32>
    %cst_34 = arith.constant dense<0.000000e+00> : vector<2x128xf32>
    %159 = tpu.matmul %157, %1, %cst_34 {dimension_numbers = #tpu.dot_dimension_numbers<[1], [0], [0], [1], [0, 0, 1, 1], [], []>} : vector<2x32xf32>, vector<32x128xf32>, vector<2x128xf32> -> vector<2x128xf32>
    %160 = arith.addf %158, %159 : vector<2x128xf32>
    %161 = vector.broadcast %17 : vector<1x128xf32> to vector<2x128xf32>
    %162 = arith.mulf %160, %161 : vector<2x128xf32>
    %163 = arith.negf %162 : vector<2x128xf32>
    %164 = math.exp %163 : vector<2x128xf32>
    %cst_35 = arith.constant 1.000000e+00 : f32
    %165 = vector.broadcast %cst_35 : f32 to vector<2x128xf32>
    %166 = arith.addf %165, %164 : vector<2x128xf32>
    %167 = arith.divf %165, %166 : vector<2x128xf32>
    %168 = vector.extract_strided_slice %167 {offsets = [0, 0], sizes = [2, 32], strides = [1, 1]} : vector<2x128xf32> to vector<2x32xf32>
    %169 = vector.extract_strided_slice %167 {offsets = [0, 32], sizes = [2, 32], strides = [1, 1]} : vector<2x128xf32> to vector<2x32xf32>
    %170 = vector.extract_strided_slice %167 {offsets = [0, 64], sizes = [2, 32], strides = [1, 1]} : vector<2x128xf32> to vector<2x32xf32>
    %cst_36 = arith.constant 2.000000e+00 : f32
    %171 = vector.broadcast %cst_36 : f32 to vector<2x32xf32>
    %172 = arith.mulf %171, %170 : vector<2x32xf32>
    %cst_37 = arith.constant 1.000000e+00 : f32
    %173 = vector.broadcast %cst_37 : f32 to vector<2x32xf32>
    %174 = arith.subf %172, %173 : vector<2x32xf32>
    %175 = vector.extract_strided_slice %167 {offsets = [0, 96], sizes = [2, 32], strides = [1, 1]} : vector<2x128xf32> to vector<2x32xf32>
    %176 = arith.mulf %169, %155 : vector<2x32xf32>
    %177 = arith.mulf %168, %174 : vector<2x32xf32>
    %178 = arith.addf %176, %177 : vector<2x32xf32>
    %179 = math.tanh %178 : vector<2x32xf32>
    %180 = arith.mulf %175, %179 : vector<2x32xf32>
    %181 = vector.extract_strided_slice %8 {offsets = [14, 0], sizes = [2, 128], strides = [1, 1]} : vector<16x128xf32> to vector<2x128xf32>
    %cst_38 = arith.constant dense<0.000000e+00> : vector<2x128xf32>
    %182 = tpu.matmul %180, %1, %cst_38 {dimension_numbers = #tpu.dot_dimension_numbers<[1], [0], [0], [1], [0, 0, 1, 1], [], []>} : vector<2x32xf32>, vector<32x128xf32>, vector<2x128xf32> -> vector<2x128xf32>
    %183 = arith.addf %181, %182 : vector<2x128xf32>
    %184 = vector.broadcast %17 : vector<1x128xf32> to vector<2x128xf32>
    %185 = arith.mulf %183, %184 : vector<2x128xf32>
    %186 = arith.negf %185 : vector<2x128xf32>
    %187 = math.exp %186 : vector<2x128xf32>
    %cst_39 = arith.constant 1.000000e+00 : f32
    %188 = vector.broadcast %cst_39 : f32 to vector<2x128xf32>
    %189 = arith.addf %188, %187 : vector<2x128xf32>
    %190 = arith.divf %188, %189 : vector<2x128xf32>
    %191 = vector.extract_strided_slice %190 {offsets = [0, 0], sizes = [2, 32], strides = [1, 1]} : vector<2x128xf32> to vector<2x32xf32>
    %192 = vector.extract_strided_slice %190 {offsets = [0, 32], sizes = [2, 32], strides = [1, 1]} : vector<2x128xf32> to vector<2x32xf32>
    %193 = vector.extract_strided_slice %190 {offsets = [0, 64], sizes = [2, 32], strides = [1, 1]} : vector<2x128xf32> to vector<2x32xf32>
    %cst_40 = arith.constant 2.000000e+00 : f32
    %194 = vector.broadcast %cst_40 : f32 to vector<2x32xf32>
    %195 = arith.mulf %194, %193 : vector<2x32xf32>
    %cst_41 = arith.constant 1.000000e+00 : f32
    %196 = vector.broadcast %cst_41 : f32 to vector<2x32xf32>
    %197 = arith.subf %195, %196 : vector<2x32xf32>
    %198 = vector.extract_strided_slice %190 {offsets = [0, 96], sizes = [2, 32], strides = [1, 1]} : vector<2x128xf32> to vector<2x32xf32>
    %199 = arith.mulf %192, %178 : vector<2x32xf32>
    %200 = arith.mulf %191, %197 : vector<2x32xf32>
    %201 = arith.addf %199, %200 : vector<2x32xf32>
    %202 = math.tanh %201 : vector<2x32xf32>
    %203 = arith.mulf %198, %202 : vector<2x32xf32>
    %c0_42 = arith.constant 0 : index
    %c0_43 = arith.constant 0 : index
    %204 = vector.load %arg5[%c0_42, %c0_43] : memref<32x32xf32, #tpu.memory_space<vmem>>, vector<32x32xf32>
    %cst_44 = arith.constant dense<0.000000e+00> : vector<2x32xf32>
    %205 = tpu.matmul %203, %204, %cst_44 {dimension_numbers = #tpu.dot_dimension_numbers<[1], [0], [0], [1], [0, 0, 1, 1], [], []>} : vector<2x32xf32>, vector<32x32xf32>, vector<2x32xf32> -> vector<2x32xf32>
    %c0_45 = arith.constant 0 : index
    %c0_46 = arith.constant 0 : index
    %206 = vector.load %arg6[%c0_45, %c0_46] : memref<1x32xf32, #tpu.memory_space<vmem>>, vector<1x32xf32>
    %207 = vector.broadcast %206 : vector<1x32xf32> to vector<2x32xf32>
    %208 = arith.addf %205, %207 : vector<2x32xf32>
    %cst_47 = arith.constant 0.000000e+00 : f32
    %209 = vector.broadcast %cst_47 : f32 to vector<2x32xf32>
    %210 = arith.maximumf %208, %209 : vector<2x32xf32>
    %c0_48 = arith.constant 0 : index
    %c0_49 = arith.constant 0 : index
    %211 = vector.load %arg7[%c0_48, %c0_49] : memref<1x32xf32, #tpu.memory_space<vmem>>, vector<1x32xf32>
    %212 = vector.broadcast %211 : vector<1x32xf32> to vector<2x32xf32>
    %213 = arith.mulf %210, %212 : vector<2x32xf32>
    %cst_50 = arith.constant dense<0.000000e+00> : vector<2xf32>
    %214 = vector.multi_reduction <add>, %213, %cst_50 [1] : vector<2x32xf32> to vector<2xf32>
    %215 = vector.shape_cast %214 : vector<2xf32> to vector<2x1xf32>
    %c0_51 = arith.constant 0 : index
    %c0_52 = arith.constant 0 : index
    %216 = vector.load %arg8[%c0_51, %c0_52] : memref<1x1xf32, #tpu.memory_space<vmem>>, vector<1x1xf32>
    %217 = vector.broadcast %216 : vector<1x1xf32> to vector<2x1xf32>
    %218 = arith.addf %215, %217 : vector<2x1xf32>
    %219 = arith.negf %218 : vector<2x1xf32>
    %220 = math.exp %219 : vector<2x1xf32>
    %cst_53 = arith.constant 1.000000e+00 : f32
    %221 = vector.broadcast %cst_53 : f32 to vector<2x1xf32>
    %222 = arith.addf %221, %220 : vector<2x1xf32>
    %223 = arith.divf %221, %222 : vector<2x1xf32>
    %c0_54 = arith.constant 0 : index
    %c0_55 = arith.constant 0 : index
    %224 = vector.load %arg9[%c0_54, %c0_55] : memref<2x1xf32, #tpu.memory_space<vmem>>, vector<2x1xf32>
    tpu.vector_store %arg9[%c0_54, %c0_55], %223 {strides = array<i32>} : memref<2x1xf32, #tpu.memory_space<vmem>>, vector<2x1xf32>,
    return
  }
  func.func @transform_0(%arg0: i32) -> (i32, i32) {
    %c0_i32 = arith.constant 0 : i32
    %c0_i32_0 = arith.constant 0 : i32
    return %arg0, %c0_i32 : i32, i32
  }
  func.func @transform_1(%arg0: i32) -> (i32, i32) {
    %c0_i32 = arith.constant 0 : i32
    %c0_i32_0 = arith.constant 0 : i32
    %c0_i32_1 = arith.constant 0 : i32
    return %c0_i32, %c0_i32_0 : i32, i32
  }
  func.func @transform_2(%arg0: i32) -> (i32, i32) {
    %c0_i32 = arith.constant 0 : i32
    %c0_i32_0 = arith.constant 0 : i32
    %c0_i32_1 = arith.constant 0 : i32
    return %c0_i32, %c0_i32_0 : i32, i32
  }
  func.func @transform_3(%arg0: i32) -> (i32, i32) {
    %c0_i32 = arith.constant 0 : i32
    %c0_i32_0 = arith.constant 0 : i32
    %c0_i32_1 = arith.constant 0 : i32
    return %c0_i32, %c0_i32_0 : i32, i32
  }
  func.func @transform_4(%arg0: i32) -> (i32, i32) {
    %c0_i32 = arith.constant 0 : i32
    %c0_i32_0 = arith.constant 0 : i32
    %c0_i32_1 = arith.constant 0 : i32
    return %c0_i32, %c0_i32_0 : i32, i32
  }
  func.func @transform_5(%arg0: i32) -> (i32, i32) {
    %c0_i32 = arith.constant 0 : i32
    %c0_i32_0 = arith.constant 0 : i32
    %c0_i32_1 = arith.constant 0 : i32
    return %c0_i32, %c0_i32_0 : i32, i32
  }
  func.func @transform_6(%arg0: i32) -> (i32, i32) {
    %c0_i32 = arith.constant 0 : i32
    %c0_i32_0 = arith.constant 0 : i32
    %c0_i32_1 = arith.constant 0 : i32
    return %c0_i32, %c0_i32_0 : i32, i32
  }
  func.func @transform_7(%arg0: i32) -> (i32, i32) {
    %c0_i32 = arith.constant 0 : i32
    %c0_i32_0 = arith.constant 0 : i32
    %c0_i32_1 = arith.constant 0 : i32
    return %c0_i32, %c0_i32_0 : i32, i32
  }
  func.func @transform_8(%arg0: i32) -> (i32, i32) {
    %c0_i32 = arith.constant 0 : i32
    %c0_i32_0 = arith.constant 0 : i32
    return %arg0, %c0_i32 : i32, i32
  }
}

</mosaic_0001>

<llo_original>
// kernel: lstm_forward.1
$region0: #{lstm_forward.1}
  #allocation0 [shape = 'u32[]', space=smem, size = 0x4, offset = 0x4, fixed_abs, tag = 'smem constant byte address 0x4 - core index']
  #allocation1 [shape = 'u32[144,128]{1,0:T(1,128)}', space=vmem, size = 0x12000, scoped, tag = 'internal scratch']
  #allocation2 [shape = 'f32[1,1]{1,0:T(1,128)S(1)}', space=vmem, size = 0x200, scoped, tag = 'scoped memory for lstm_forward.1']
  %s0 = inlined_call_operand.vmem [shape: f32[16,1], index: 0, kind: input, shape index: {}]
  %s1 = inlined_call_operand.vmem [shape: f32[1,128], index: 1, kind: input, shape index: {}]
  %s2 = inlined_call_operand.vmem [shape: f32[32,128], index: 2, kind: input, shape index: {}]
  %s3 = inlined_call_operand.vmem [shape: f32[1,128], index: 3, kind: input, shape index: {}]
  %s4 = inlined_call_operand.hbm [shape: f32[32,32], index: 4, kind: input, shape index: {}]
  %s5 = inlined_call_operand.vmem [shape: f32[1,32], index: 5, kind: input, shape index: {}]
  %s6 = inlined_call_operand.vmem [shape: f32[1,32], index: 6, kind: input, shape index: {}]
  %s7 = inlined_call_operand.<no memory space> [shape: f32[1,1], index: 7, kind: input, shape index: {}]
  %s8 = inlined_call_operand.vmem [shape: f32[2,1], index: 8, kind: output, shape index: {}]
  %s9 = sld [smem:[#allocation0]]
  $region46: #{lstm_forward.1} parent=0
    _
  %s11 = ssub.s32 1, %s9
  %s12 = scalar_select 0, %s11, %s9
  %v13 = vstv %s7
  %14 = vst [vmem:[#allocation2] sm:$0x1] %v13
  $region1: #{lstm_forward.1} parent=0
    #allocation3 [shape = 'u8[16384]{0}', space=vmem, size = 0x4000, scoped, tag = 'input window, operand 4, single buffered']
    #allocation4 [shape = 's32[1]{0}', space=sflag, size = 0x4, scoped, tag = 'scoped memory for lstm_forward.1']
    %15 = vsyncpa [#allocation4], 0
    // Predicated region
    $region2: #{lstm_forward.1} parent=1 // pred_check
      _
    $region3: #{lstm_forward.1} parent=1 // pred_check_branch
      %17 = sbr.rel (0) target = $region5
    $region4: #{lstm_forward.1} parent=1 // pred_region
      _
    $region5: #{lstm_forward.1} parent=1 // pred_fallthru
      _
    // Predicated region
    $region6: #{lstm_forward.1} parent=1 // pred_check
      _
    $region7: #{lstm_forward.1} parent=1 // pred_check_branch
      %19 = sbr.rel (0) target = $region9
    $region8: #{lstm_forward.1} parent=1 // pred_region
      _
    $region9: #{lstm_forward.1} parent=1 // pred_fallthru
      _
    // Predicated region
    $region10: #{lstm_forward.1} parent=1 // pred_check
      _
    $region11: #{lstm_forward.1} parent=1 // pred_check_branch
      %21 = sbr.rel (0) target = $region13
    $region12: #{lstm_forward.1} parent=1 // pred_region
      _
    $region13: #{lstm_forward.1} parent=1 // pred_fallthru
      _
    // Predicated region
    $region14: #{lstm_forward.1} parent=1 // pred_check
      _
    $region15: #{lstm_forward.1} parent=1 // pred_check_branch
      %23 = sbr.rel (0) target = $region17
    $region16: #{lstm_forward.1} parent=1 // pred_region
      _
    $region17: #{lstm_forward.1} parent=1 // pred_fallthru
      _
    // Predicated region
    $region18: #{lstm_forward.1} parent=1 // pred_check
      _
    $region19: #{lstm_forward.1} parent=1 // pred_check_branch
      %25 = sbr.rel (0) target = $region21
    $region20: #{lstm_forward.1} parent=1 // pred_region
      %s27 = ssub.s32 512, 512
      %28 = vsyncadd [#allocation4], %s27
      %s29 = sshll.u32 [#allocation3], 4
      %s30 = int_to_ptr.vmem [resolvable:$true] %s29
      %35 = dma.hbm_to_vmem [thread:$0]  %s4, 512, %s30, [#allocation4], 128, 128, 8
    $region21: #{lstm_forward.1} parent=1 // pred_fallthru
      _
    // Predicated region
    $region22: #{lstm_forward.1} parent=1 // pred_check
      _
    $region23: #{lstm_forward.1} parent=1 // pred_check_branch
      %37 = sbr.rel (0) target = $region25
    $region24: #{lstm_forward.1} parent=1 // pred_region
      _
    $region25: #{lstm_forward.1} parent=1 // pred_fallthru
      _
    // Predicated region
    $region26: #{lstm_forward.1} parent=1 // pred_check
      _
    $region27: #{lstm_forward.1} parent=1 // pred_check_branch
      %39 = sbr.rel (0) target = $region29
    $region28: #{lstm_forward.1} parent=1 // pred_region
      _
    $region29: #{lstm_forward.1} parent=1 // pred_fallthru
      _
    // Predicated region
    $region30: #{lstm_forward.1} parent=1 // pred_check
      _
    $region31: #{lstm_forward.1} parent=1 // pred_check_branch
      %41 = sbr.rel (0) target = $region33
    $region32: #{lstm_forward.1} parent=1 // pred_region
      _
    $region33: #{lstm_forward.1} parent=1 // pred_fallthru
      _
    // Predicated region
    $region34: #{lstm_forward.1} parent=1 // pred_check
      _
    $region35: #{lstm_forward.1} parent=1 // pred_check_branch
      %43 = sbr.rel (0) target = $region37
    $region36: #{lstm_forward.1} parent=1 // pred_region
      %44 = dma.done [#allocation4], 512
    $region37: #{lstm_forward.1} parent=1 // pred_fallthru
      _
    %v45 = vld [vmem:[%s1] sm:$0x1]
    %v46 = vld [vmem:[%s2] sm:$0xff]
    %v47 = vld [vmem:[%s2 + $0x8] sm:$0xff]
    %v48 = vld [vmem:[%s2 + $0x10] sm:$0xff]
    %v49 = vld [vmem:[%s2 + $0x18] sm:$0xff]
    %v50 = vld [vmem:[%s3] sm:$0x1]
    %v51 = vld [vmem:[%s0] sm:$0xff]
    %v52 = vld [vmem:[%s0 + $0x8] sm:$0xff]
    %54 = vset.pattern.permute.xlu0 0
    %55 = vperm.xlu0 %54, %v51
    %v56 = vpop.permute.xlu0 %55
    %59 = vset.pattern.permute.xlu0 0
    %60 = vperm.xlu0 %59, %v52
    %v61 = vpop.permute.xlu0 %60
    %v64 = vlaneseq
    %v65 = vshrl.u32 %v64, 7
    %v66 = vsub.s32 0, %v65
    %v67 = vrot.slane %v45, %v66
    %v69 = vmul.f32 %v56, %v67
    %v70 = vmul.f32 %v61, %v67
    %v72 = vlaneseq
    %v73 = vshrl.u32 %v72, 7
    %v74 = vsub.s32 0, %v73
    %v75 = vrot.slane %v50, %v74
    %v77 = vadd.f32 %v69, %v75
    %v78 = vadd.f32 %v70, %v75
    %v79 = vlaneseq
    %v80 = vand.u32 %v79, 127
    %vm81 = vcmp.ge.s32.totalorder %v80, 64
    %vm82 = vcmp.lt.s32.totalorder %v80, 96
    %vm83 = vmand %vm81, %vm82
    %v84 = vsel %vm83, 2.0, 1.0
    %vm85 = vcmask 261120
    %v87 = vsel %vm85, 0.0, 0
    %89 = vmatprep.subr.mxu0 0.0
    %90 = vmatpush1.msra.mxu0 0.0
    %91 = vmatprep.subr.mxu0 0.0
    %92 = vmatpush1.msra.mxu0 0.0
    %93 = vmatprep.subr.mxu0 0.0
    %94 = vmatpush1.msra.mxu0 0.0
    %95 = vmatprep.subr.mxu0 0.0
    %96 = vmatpush1.msra.mxu0 0.0
    %97 = vmatprep.subr.mxu0 0.0
    %98 = vmatpush1.msra.mxu0 0.0
    %99 = vmatprep.subr.mxu0 0.0
    %100 = vmatpush1.msra.mxu0 0.0
    %101 = vmatprep.subr.mxu0 0.0
    %102 = vmatpush1.msra.mxu0 0.0
    %103 = vmatprep.subr.mxu0 0.0
    %104 = vmatpush1.msra.mxu0 0.0
    %105 = vmatprep.subr.mxu0 0.0
    %106 = vmatpush1.msra.mxu0 0.0
    %107 = vmatprep.subr.mxu0 0.0
    %108 = vmatpush1.msra.mxu0 0.0
    %109 = vmatprep.subr.mxu0 0.0
    %110 = vmatpush1.msra.mxu0 0.0
    %111 = vmatprep.subr.mxu0 0.0
    %112 = vmatpush1.msra.mxu0 0.0
    %113 = vmatprep.subr.mxu0 0.0
    %114 = vmatpush1.msra.mxu0 %v49
    %115 = vmatprep.subr.mxu0 0.0
    %116 = vmatpush1.msra.mxu0 %v48
    %117 = vmatprep.subr.mxu0 0.0
    %118 = vmatpush1.msra.mxu0 %v47
    %119 = vmatprep.subr.mxu0 0.0
    %120 = vmatpush1.msra.mxu0 %v46
    %121 = vmatprep.subr.mxu0 0.0
    %122 = vmatpush2.msra.mxu0 0.0
    %123 = vmatprep.subr.mxu0 0.0
    %124 = vmatpush2.msra.mxu0 0.0
    %125 = vmatprep.subr.mxu0 0.0
    %126 = vmatpush2.msra.mxu0 0.0
    %127 = vmatprep.subr.mxu0 0.0
    %128 = vmatpush2.msra.mxu0 0.0
    %129 = vmatprep.subr.mxu0 0.0
    %130 = vmatpush2.msra.mxu0 0.0
    %131 = vmatprep.subr.mxu0 0.0
    %132 = vmatpush2.msra.mxu0 0.0
    %133 = vmatprep.subr.mxu0 0.0
    %134 = vmatpush2.msra.mxu0 0.0
    %135 = vmatprep.subr.mxu0 0.0
    %136 = vmatpush2.msra.mxu0 0.0
    %137 = vmatprep.subr.mxu0 0.0
    %138 = vmatpush2.msra.mxu0 0.0
    %139 = vmatprep.subr.mxu0 0.0
    %140 = vmatpush2.msra.mxu0 0.0
    %141 = vmatprep.subr.mxu0 0.0
    %142 = vmatpush2.msra.mxu0 0.0
    %143 = vmatprep.subr.mxu0 0.0
    %144 = vmatpush2.msra.mxu0 0.0
    %145 = vmatprep.subr.mxu0 0.0
    %146 = vmatpush2.msra.mxu0 0.0
    %147 = vmatprep.subr.mxu0 0.0
    %148 = vmatpush2.msra.mxu0 0.0
    %149 = vmatprep.subr.mxu0 0.0
    %150 = vmatpush2.msra.mxu0 0.0
    %151 = vmatprep.subr.mxu0 0.0
    %152 = vmatpush2.msra.mxu0 0.0
    %153 = vmatprep.mubr.f32.mxu0 0.0
    %154 = vmatmul.mubr.f32.gmra.mxu0 %v87
    %v155 = vpop.f32.mrf.mxu0
    %v156 = vadd.f32 0.0, %v155
    %v157 = vpop.f32.mrf.mxu0
    %158 = vdwg.mxu0
    %v159 = vadd.f32 %v77, %v156
    %v160 = vmul.f32 %v159, %v84
    %v161 = vxor.u32 %v160, 2147483648
    %v162 = vmul.f32 %v161, 1.442695
    %v163 = vpow.pop %v162
    %v164 = vadd.f32 %v163, 1.0
    %v165 = vrcp.pop %v164
    %v166 = vmul.f32 1.0, %v165
    %v167 = vmul.f32 %v166, 2.0
    %v168 = vsub.f32 %v167, 1.0
    %v169 = vmul.f32 %v166, 0.0
    %171 = vrot.lane.b32.xlu0 %v168, 64
    %v172 = vpop.permute.xlu0 %171
    %v174 = vmul.f32 %v166, %v172
    %176 = vrot.lane.b32.xlu0 %v174, 32
    %v177 = vpop.permute.xlu0 %176
    %v179 = vadd.f32 %v169, %v177
    %v180 = vtanh.pop %v179
    %182 = vrot.lane.b32.xlu0 %v180, 64
    %v183 = vpop.permute.xlu0 %182
    %v185 = vmul.f32 %v166, %v183
    %187 = vrot.lane.b32.xlu0 %v185, 32
    %v188 = vpop.permute.xlu0 %187
    %v189 = vsel %vm85, %v188, 0
    %191 = vmatprep.subr.mxu0 0.0
    %192 = vmatpush1.msra.mxu0 0.0
    %193 = vmatprep.subr.mxu0 0.0
    %194 = vmatpush1.msra.mxu0 0.0
    %195 = vmatprep.subr.mxu0 0.0
    %196 = vmatpush1.msra.mxu0 0.0
    %197 = vmatprep.subr.mxu0 0.0
    %198 = vmatpush1.msra.mxu0 0.0
    %199 = vmatprep.subr.mxu0 0.0
    %200 = vmatpush1.msra.mxu0 0.0
    %201 = vmatprep.subr.mxu0 0.0
    %202 = vmatpush1.msra.mxu0 0.0
    %203 = vmatprep.subr.mxu0 0.0
    %204 = vmatpush1.msra.mxu0 0.0
    %205 = vmatprep.subr.mxu0 0.0
    %206 = vmatpush1.msra.mxu0 0.0
    %207 = vmatprep.subr.mxu0 0.0
    %208 = vmatpush1.msra.mxu0 0.0
    %209 = vmatprep.subr.mxu0 0.0
    %210 = vmatpush1.msra.mxu0 0.0
    %211 = vmatprep.subr.mxu0 0.0
    %212 = vmatpush1.msra.mxu0 0.0
    %213 = vmatprep.subr.mxu0 0.0
    %214 = vmatpush1.msra.mxu0 0.0
    %215 = vmatprep.subr.mxu0 0.0
    %216 = vmatpush1.msra.mxu0 %v49
    %217 = vmatprep.subr.mxu0 0.0
    %218 = vmatpush1.msra.mxu0 %v48
    %219 = vmatprep.subr.mxu0 0.0
    %220 = vmatpush1.msra.mxu0 %v47
    %221 = vmatprep.subr.mxu0 0.0
    %222 = vmatpush1.msra.mxu0 %v46
    %223 = vmatprep.subr.mxu0 0.0
    %224 = vmatpush2.msra.mxu0 0.0
    %225 = vmatprep.subr.mxu0 0.0
    %226 = vmatpush2.msra.mxu0 0.0
    %227 = vmatprep.subr.mxu0 0.0
    %228 = vmatpush2.msra.mxu0 0.0
    %229 = vmatprep.subr.mxu0 0.0
    %230 = vmatpush2.msra.mxu0 0.0
    %231 = vmatprep.subr.mxu0 0.0
    %232 = vmatpush2.msra.mxu0 0.0
    %233 = vmatprep.subr.mxu0 0.0
    %234 = vmatpush2.msra.mxu0 0.0
    %235 = vmatprep.subr.mxu0 0.0
    %236 = vmatpush2.msra.mxu0 0.0
    %237 = vmatprep.subr.mxu0 0.0
    %238 = vmatpush2.msra.mxu0 0.0
    %239 = vmatprep.subr.mxu0 0.0
    %240 = vmatpush2.msra.mxu0 0.0
    %241 = vmatprep.subr.mxu0 0.0
    %242 = vmatpush2.msra.mxu0 0.0
    %243 = vmatprep.subr.mxu0 0.0
    %244 = vmatpush2.msra.mxu0 0.0
    %245 = vmatprep.subr.mxu0 0.0
    %246 = vmatpush2.msra.mxu0 0.0
    %247 = vmatprep.subr.mxu0 0.0
    %248 = vmatpush2.msra.mxu0 0.0
    %249 = vmatprep.subr.mxu0 0.0
    %250 = vmatpush2.msra.mxu0 0.0
    %251 = vmatprep.subr.mxu0 0.0
    %252 = vmatpush2.msra.mxu0 0.0
    %253 = vmatprep.subr.mxu0 0.0
    %254 = vmatpush2.msra.mxu0 0.0
    %255 = vmatprep.mubr.f32.mxu0 0.0
    %256 = vmatmul.mubr.f32.gmra.mxu0 %v189
    %v257 = vpop.f32.mrf.mxu0
    %v258 = vadd.f32 0.0, %v257
    %v259 = vpop.f32.mrf.mxu0
    %260 = vdwg.mxu0
    %v262 = vrot.slane %v258, 6
    %v264 = vadd.f32 %v77, %v262
    %v265 = vmul.f32 %v264, %v84
    %v266 = vxor.u32 %v265, 2147483648
    %v267 = vmul.f32 %v266, 1.442695
    %v268 = vpow.pop %v267
    %v269 = vadd.f32 %v268, 1.0
    %v270 = vrcp.pop %v269
    %v271 = vmul.f32 1.0, %v270
    %v272 = vmul.f32 %v271, 2.0
    %v273 = vsub.f32 %v272, 1.0
    %v275 = vrot.slane %v179, 6
    %v277 = vmul.f32 %v271, %v275
    %279 = vrot.lane.b32.xlu0 %v273, 64
    %v280 = vpop.permute.xlu0 %279
    %v282 = vmul.f32 %v271, %v280
    %284 = vrot.lane.b32.xlu0 %v282, 32
    %v285 = vpop.permute.xlu0 %284
    %v287 = vadd.f32 %v277, %v285
    %v288 = vtanh.pop %v287
    %290 = vrot.lane.b32.xlu0 %v288, 64
    %v291 = vpop.permute.xlu0 %290
    %v293 = vmul.f32 %v271, %v291
    %v295 = vrot.slane %v293, 2
    %296 = vrot.lane.b32.xlu0 %v295, 32
    %v297 = vpop.permute.xlu0 %296
    %v298 = vsel %vm85, %v297, 0
    %300 = vmatprep.subr.mxu0 0.0
    %301 = vmatpush1.msra.mxu0 0.0
    %302 = vmatprep.subr.mxu0 0.0
    %303 = vmatpush1.msra.mxu0 0.0
    %304 = vmatprep.subr.mxu0 0.0
    %305 = vmatpush1.msra.mxu0 0.0
    %306 = vmatprep.subr.mxu0 0.0
    %307 = vmatpush1.msra.mxu0 0.0
    %308 = vmatprep.subr.mxu0 0.0
    %309 = vmatpush1.msra.mxu0 0.0
    %310 = vmatprep.subr.mxu0 0.0
    %311 = vmatpush1.msra.mxu0 0.0
    %312 = vmatprep.subr.mxu0 0.0
    %313 = vmatpush1.msra.mxu0 0.0
    %314 = vmatprep.subr.mxu0 0.0
    %315 = vmatpush1.msra.mxu0 0.0
    %316 = vmatprep.subr.mxu0 0.0
    %317 = vmatpush1.msra.mxu0 0.0
    %318 = vmatprep.subr.mxu0 0.0
    %319 = vmatpush1.msra.mxu0 0.0
    %320 = vmatprep.subr.mxu0 0.0
    %321 = vmatpush1.msra.mxu0 0.0
    %322 = vmatprep.subr.mxu0 0.0
    %323 = vmatpush1.msra.mxu0 0.0
    %324 = vmatprep.subr.mxu0 0.0
    %325 = vmatpush1.msra.mxu0 %v49
    %326 = vmatprep.subr.mxu0 0.0
    %327 = vmatpush1.msra.mxu0 %v48
    %328 = vmatprep.subr.mxu0 0.0
    %329 = vmatpush1.msra.mxu0 %v47
    %330 = vmatprep.subr.mxu0 0.0
    %331 = vmatpush1.msra.mxu0 %v46
    %332 = vmatprep.subr.mxu0 0.0
    %333 = vmatpush2.msra.mxu0 0.0
    %334 = vmatprep.subr.mxu0 0.0
    %335 = vmatpush2.msra.mxu0 0.0
    %336 = vmatprep.subr.mxu0 0.0
    %337 = vmatpush2.msra.mxu0 0.0
    %338 = vmatprep.subr.mxu0 0.0
    %339 = vmatpush2.msra.mxu0 0.0
    %340 = vmatprep.subr.mxu0 0.0
    %341 = vmatpush2.msra.mxu0 0.0
    %342 = vmatprep.subr.mxu0 0.0
    %343 = vmatpush2.msra.mxu0 0.0
    %344 = vmatprep.subr.mxu0 0.0
    %345 = vmatpush2.msra.mxu0 0.0
    %346 = vmatprep.subr.mxu0 0.0
    %347 = vmatpush2.msra.mxu0 0.0
    %348 = vmatprep.subr.mxu0 0.0
    %349 = vmatpush2.msra.mxu0 0.0
    %350 = vmatprep.subr.mxu0 0.0
    %351 = vmatpush2.msra.mxu0 0.0
    %352 = vmatprep.subr.mxu0 0.0
    %353 = vmatpush2.msra.mxu0 0.0
    %354 = vmatprep.subr.mxu0 0.0
    %355 = vmatpush2.msra.mxu0 0.0
    %356 = vmatprep.subr.mxu0 0.0
    %357 = vmatpush2.msra.mxu0 0.0
    %358 = vmatprep.subr.mxu0 0.0
    %359 = vmatpush2.msra.mxu0 0.0
    %360 = vmatprep.subr.mxu0 0.0
    %361 = vmatpush2.msra.mxu0 0.0
    %362 = vmatprep.subr.mxu0 0.0
    %363 = vmatpush2.msra.mxu0 0.0
    %364 = vmatprep.mubr.f32.mxu0 0.0
    %365 = vmatmul.mubr.f32.gmra.mxu0 %v298
    %v366 = vpop.f32.mrf.mxu0
    %v367 = vadd.f32 0.0, %v366
    %v368 = vpop.f32.mrf.mxu0
    %369 = vdwg.mxu0
    %v371 = vrot.slane %v367, 4
    %v373 = vadd.f32 %v77, %v371
    %v374 = vmul.f32 %v373, %v84
    %v375 = vxor.u32 %v374, 2147483648
    %v376 = vmul.f32 %v375, 1.442695
    %v377 = vpow.pop %v376
    %v378 = vadd.f32 %v377, 1.0
    %v379 = vrcp.pop %v378
    %v380 = vmul.f32 1.0, %v379
    %v381 = vmul.f32 %v380, 2.0
    %v382 = vsub.f32 %v381, 1.0
    %v384 = vrot.slane %v287, 6
    %v386 = vmul.f32 %v380, %v384
    %388 = vrot.lane.b32.xlu0 %v382, 64
    %v389 = vpop.permute.xlu0 %388
    %v391 = vmul.f32 %v380, %v389
    %393 = vrot.lane.b32.xlu0 %v391, 32
    %v394 = vpop.permute.xlu0 %393
    %v396 = vadd.f32 %v386, %v394
    %v397 = vtanh.pop %v396
    %399 = vrot.lane.b32.xlu0 %v397, 64
    %v400 = vpop.permute.xlu0 %399
    %v402 = vmul.f32 %v380, %v400
    %v404 = vrot.slane %v402, 4
    %405 = vrot.lane.b32.xlu0 %v404, 32
    %v406 = vpop.permute.xlu0 %405
    %v407 = vsel %vm85, %v406, 0
    %409 = vmatprep.subr.mxu0 0.0
    %410 = vmatpush1.msra.mxu0 0.0
    %411 = vmatprep.subr.mxu0 0.0
    %412 = vmatpush1.msra.mxu0 0.0
    %413 = vmatprep.subr.mxu0 0.0
    %414 = vmatpush1.msra.mxu0 0.0
    %415 = vmatprep.subr.mxu0 0.0
    %416 = vmatpush1.msra.mxu0 0.0
    %417 = vmatprep.subr.mxu0 0.0
    %418 = vmatpush1.msra.mxu0 0.0
    %419 = vmatprep.subr.mxu0 0.0
    %420 = vmatpush1.msra.mxu0 0.0
    %421 = vmatprep.subr.mxu0 0.0
    %422 = vmatpush1.msra.mxu0 0.0
    %423 = vmatprep.subr.mxu0 0.0
    %424 = vmatpush1.msra.mxu0 0.0
    %425 = vmatprep.subr.mxu0 0.0
    %426 = vmatpush1.msra.mxu0 0.0
    %427 = vmatprep.subr.mxu0 0.0
    %428 = vmatpush1.msra.mxu0 0.0
    %429 = vmatprep.subr.mxu0 0.0
    %430 = vmatpush1.msra.mxu0 0.0
    %431 = vmatprep.subr.mxu0 0.0
    %432 = vmatpush1.msra.mxu0 0.0
    %433 = vmatprep.subr.mxu0 0.0
    %434 = vmatpush1.msra.mxu0 %v49
    %435 = vmatprep.subr.mxu0 0.0
    %436 = vmatpush1.msra.mxu0 %v48
    %437 = vmatprep.subr.mxu0 0.0
    %438 = vmatpush1.msra.mxu0 %v47
    %439 = vmatprep.subr.mxu0 0.0
    %440 = vmatpush1.msra.mxu0 %v46
    %441 = vmatprep.subr.mxu0 0.0
    %442 = vmatpush2.msra.mxu0 0.0
    %443 = vmatprep.subr.mxu0 0.0
    %444 = vmatpush2.msra.mxu0 0.0
    %445 = vmatprep.subr.mxu0 0.0
    %446 = vmatpush2.msra.mxu0 0.0
    %447 = vmatprep.subr.mxu0 0.0
    %448 = vmatpush2.msra.mxu0 0.0
    %449 = vmatprep.subr.mxu0 0.0
    %450 = vmatpush2.msra.mxu0 0.0
    %451 = vmatprep.subr.mxu0 0.0
    %452 = vmatpush2.msra.mxu0 0.0
    %453 = vmatprep.subr.mxu0 0.0
    %454 = vmatpush2.msra.mxu0 0.0
    %455 = vmatprep.subr.mxu0 0.0
    %456 = vmatpush2.msra.mxu0 0.0
    %457 = vmatprep.subr.mxu0 0.0
    %458 = vmatpush2.msra.mxu0 0.0
    %459 = vmatprep.subr.mxu0 0.0
    %460 = vmatpush2.msra.mxu0 0.0
    %461 = vmatprep.subr.mxu0 0.0
    %462 = vmatpush2.msra.mxu0 0.0
    %463 = vmatprep.subr.mxu0 0.0
    %464 = vmatpush2.msra.mxu0 0.0
    %465 = vmatprep.subr.mxu0 0.0
    %466 = vmatpush2.msra.mxu0 0.0
    %467 = vmatprep.subr.mxu0 0.0
    %468 = vmatpush2.msra.mxu0 0.0
    %469 = vmatprep.subr.mxu0 0.0
    %470 = vmatpush2.msra.mxu0 0.0
    %471 = vmatprep.subr.mxu0 0.0
    %472 = vmatpush2.msra.mxu0 0.0
    %473 = vmatprep.mubr.f32.mxu0 0.0
    %474 = vmatmul.mubr.f32.gmra.mxu0 %v407
    %v475 = vpop.f32.mrf.mxu0
    %v476 = vadd.f32 0.0, %v475
    %v477 = vpop.f32.mrf.mxu0
    %478 = vdwg.mxu0
    %v480 = vrot.slane %v476, 2
    %v482 = vadd.f32 %v77, %v480
    %v483 = vmul.f32 %v482, %v84
    %v484 = vxor.u32 %v483, 2147483648
    %v485 = vmul.f32 %v484, 1.442695
    %v486 = vpow.pop %v485
    %v487 = vadd.f32 %v486, 1.0
    %v488 = vrcp.pop %v487
    %v489 = vmul.f32 1.0, %v488
    %v490 = vmul.f32 %v489, 2.0
    %v491 = vsub.f32 %v490, 1.0
    %v493 = vrot.slane %v396, 6
    %v495 = vmul.f32 %v489, %v493
    %497 = vrot.lane.b32.xlu0 %v491, 64
    %v498 = vpop.permute.xlu0 %497
    %v500 = vmul.f32 %v489, %v498
    %502 = vrot.lane.b32.xlu0 %v500, 32
    %v503 = vpop.permute.xlu0 %502
    %v505 = vadd.f32 %v495, %v503
    %v506 = vtanh.pop %v505
    %508 = vrot.lane.b32.xlu0 %v506, 64
    %v509 = vpop.permute.xlu0 %508
    %v511 = vmul.f32 %v489, %v509
    %v513 = vrot.slane %v511, 6
    %514 = vrot.lane.b32.xlu0 %v513, 32
    %v515 = vpop.permute.xlu0 %514
    %v516 = vsel %vm85, %v515, 0
    %518 = vmatprep.subr.mxu0 0.0
    %519 = vmatpush1.msra.mxu0 0.0
    %520 = vmatprep.subr.mxu0 0.0
    %521 = vmatpush1.msra.mxu0 0.0
    %522 = vmatprep.subr.mxu0 0.0
    %523 = vmatpush1.msra.mxu0 0.0
    %524 = vmatprep.subr.mxu0 0.0
    %525 = vmatpush1.msra.mxu0 0.0
    %526 = vmatprep.subr.mxu0 0.0
    %527 = vmatpush1.msra.mxu0 0.0
    %528 = vmatprep.subr.mxu0 0.0
    %529 = vmatpush1.msra.mxu0 0.0
    %530 = vmatprep.subr.mxu0 0.0
    %531 = vmatpush1.msra.mxu0 0.0
    %532 = vmatprep.subr.mxu0 0.0
    %533 = vmatpush1.msra.mxu0 0.0
    %534 = vmatprep.subr.mxu0 0.0
    %535 = vmatpush1.msra.mxu0 0.0
    %536 = vmatprep.subr.mxu0 0.0
    %537 = vmatpush1.msra.mxu0 0.0
    %538 = vmatprep.subr.mxu0 0.0
    %539 = vmatpush1.msra.mxu0 0.0
    %540 = vmatprep.subr.mxu0 0.0
    %541 = vmatpush1.msra.mxu0 0.0
    %542 = vmatprep.subr.mxu0 0.0
    %543 = vmatpush1.msra.mxu0 %v49
    %544 = vmatprep.subr.mxu0 0.0
    %545 = vmatpush1.msra.mxu0 %v48
    %546 = vmatprep.subr.mxu0 0.0
    %547 = vmatpush1.msra.mxu0 %v47
    %548 = vmatprep.subr.mxu0 0.0
    %549 = vmatpush1.msra.mxu0 %v46
    %550 = vmatprep.subr.mxu0 0.0
    %551 = vmatpush2.msra.mxu0 0.0
    %552 = vmatprep.subr.mxu0 0.0
    %553 = vmatpush2.msra.mxu0 0.0
    %554 = vmatprep.subr.mxu0 0.0
    %555 = vmatpush2.msra.mxu0 0.0
    %556 = vmatprep.subr.mxu0 0.0
    %557 = vmatpush2.msra.mxu0 0.0
    %558 = vmatprep.subr.mxu0 0.0
    %559 = vmatpush2.msra.mxu0 0.0
    %560 = vmatprep.subr.mxu0 0.0
    %561 = vmatpush2.msra.mxu0 0.0
    %562 = vmatprep.subr.mxu0 0.0
    %563 = vmatpush2.msra.mxu0 0.0
    %564 = vmatprep.subr.mxu0 0.0
    %565 = vmatpush2.msra.mxu0 0.0
    %566 = vmatprep.subr.mxu0 0.0
    %567 = vmatpush2.msra.mxu0 0.0
    %568 = vmatprep.subr.mxu0 0.0
    %569 = vmatpush2.msra.mxu0 0.0
    %570 = vmatprep.subr.mxu0 0.0
    %571 = vmatpush2.msra.mxu0 0.0
    %572 = vmatprep.subr.mxu0 0.0
    %573 = vmatpush2.msra.mxu0 0.0
    %574 = vmatprep.subr.mxu0 0.0
    %575 = vmatpush2.msra.mxu0 0.0
    %576 = vmatprep.subr.mxu0 0.0
    %577 = vmatpush2.msra.mxu0 0.0
    %578 = vmatprep.subr.mxu0 0.0
    %579 = vmatpush2.msra.mxu0 0.0
    %580 = vmatprep.subr.mxu0 0.0
    %581 = vmatpush2.msra.mxu0 0.0
    %582 = vmatprep.mubr.f32.mxu0 0.0
    %583 = vmatmul.mubr.f32.gmra.mxu0 %v516
    %v584 = vpop.f32.mrf.mxu0
    %v585 = vadd.f32 0.0, %v584
    %v586 = vpop.f32.mrf.mxu0
    %587 = vdwg.mxu0
    %v588 = vadd.f32 %v78, %v585
    %v589 = vmul.f32 %v588, %v84
    %v590 = vxor.u32 %v589, 2147483648
    %v591 = vmul.f32 %v590, 1.442695
    %v592 = vpow.pop %v591
    %v593 = vadd.f32 %v592, 1.0
    %v594 = vrcp.pop %v593
    %v595 = vmul.f32 1.0, %v594
    %v596 = vmul.f32 %v595, 2.0
    %v597 = vsub.f32 %v596, 1.0
    %v599 = vrot.slane %v505, 6
    %v601 = vmul.f32 %v595, %v599
    %603 = vrot.lane.b32.xlu0 %v597, 64
    %v604 = vpop.permute.xlu0 %603
    %v606 = vmul.f32 %v595, %v604
    %608 = vrot.lane.b32.xlu0 %v606, 32
    %v609 = vpop.permute.xlu0 %608
    %v611 = vadd.f32 %v601, %v609
    %v612 = vtanh.pop %v611
    %614 = vrot.lane.b32.xlu0 %v612, 64
    %v615 = vpop.permute.xlu0 %614
    %v617 = vmul.f32 %v595, %v615
    %619 = vrot.lane.b32.xlu0 %v617, 32
    %v620 = vpop.permute.xlu0 %619
    %v621 = vsel %vm85, %v620, 0
    %623 = vmatprep.subr.mxu0 0.0
    %624 = vmatpush1.msra.mxu0 0.0
    %625 = vmatprep.subr.mxu0 0.0
    %626 = vmatpush1.msra.mxu0 0.0
    %627 = vmatprep.subr.mxu0 0.0
    %628 = vmatpush1.msra.mxu0 0.0
    %629 = vmatprep.subr.mxu0 0.0
    %630 = vmatpush1.msra.mxu0 0.0
    %631 = vmatprep.subr.mxu0 0.0
    %632 = vmatpush1.msra.mxu0 0.0
    %633 = vmatprep.subr.mxu0 0.0
    %634 = vmatpush1.msra.mxu0 0.0
    %635 = vmatprep.subr.mxu0 0.0
    %636 = vmatpush1.msra.mxu0 0.0
    %637 = vmatprep.subr.mxu0 0.0
    %638 = vmatpush1.msra.mxu0 0.0
    %639 = vmatprep.subr.mxu0 0.0
    %640 = vmatpush1.msra.mxu0 0.0
    %641 = vmatprep.subr.mxu0 0.0
    %642 = vmatpush1.msra.mxu0 0.0
    %643 = vmatprep.subr.mxu0 0.0
    %644 = vmatpush1.msra.mxu0 0.0
    %645 = vmatprep.subr.mxu0 0.0
    %646 = vmatpush1.msra.mxu0 0.0
    %647 = vmatprep.subr.mxu0 0.0
    %648 = vmatpush1.msra.mxu0 %v49
    %649 = vmatprep.subr.mxu0 0.0
    %650 = vmatpush1.msra.mxu0 %v48
    %651 = vmatprep.subr.mxu0 0.0
    %652 = vmatpush1.msra.mxu0 %v47
    %653 = vmatprep.subr.mxu0 0.0
    %654 = vmatpush1.msra.mxu0 %v46
    %655 = vmatprep.subr.mxu0 0.0
    %656 = vmatpush2.msra.mxu0 0.0
    %657 = vmatprep.subr.mxu0 0.0
    %658 = vmatpush2.msra.mxu0 0.0
    %659 = vmatprep.subr.mxu0 0.0
    %660 = vmatpush2.msra.mxu0 0.0
    %661 = vmatprep.subr.mxu0 0.0
    %662 = vmatpush2.msra.mxu0 0.0
    %663 = vmatprep.subr.mxu0 0.0
    %664 = vmatpush2.msra.mxu0 0.0
    %665 = vmatprep.subr.mxu0 0.0
    %666 = vmatpush2.msra.mxu0 0.0
    %667 = vmatprep.subr.mxu0 0.0
    %668 = vmatpush2.msra.mxu0 0.0
    %669 = vmatprep.subr.mxu0 0.0
    %670 = vmatpush2.msra.mxu0 0.0
    %671 = vmatprep.subr.mxu0 0.0
    %672 = vmatpush2.msra.mxu0 0.0
    %673 = vmatprep.subr.mxu0 0.0
    %674 = vmatpush2.msra.mxu0 0.0
    %675 = vmatprep.subr.mxu0 0.0
    %676 = vmatpush2.msra.mxu0 0.0
    %677 = vmatprep.subr.mxu0 0.0
    %678 = vmatpush2.msra.mxu0 0.0
    %679 = vmatprep.subr.mxu0 0.0
    %680 = vmatpush2.msra.mxu0 0.0
    %681 = vmatprep.subr.mxu0 0.0
    %682 = vmatpush2.msra.mxu0 0.0
    %683 = vmatprep.subr.mxu0 0.0
    %684 = vmatpush2.msra.mxu0 0.0
    %685 = vmatprep.subr.mxu0 0.0
    %686 = vmatpush2.msra.mxu0 0.0
    %687 = vmatprep.mubr.f32.mxu0 0.0
    %688 = vmatmul.mubr.f32.gmra.mxu0 %v621
    %v689 = vpop.f32.mrf.mxu0
    %v690 = vadd.f32 0.0, %v689
    %v691 = vpop.f32.mrf.mxu0
    %692 = vdwg.mxu0
    %v694 = vrot.slane %v690, 6
    %v696 = vadd.f32 %v78, %v694
    %v697 = vmul.f32 %v696, %v84
    %v698 = vxor.u32 %v697, 2147483648
    %v699 = vmul.f32 %v698, 1.442695
    %v700 = vpow.pop %v699
    %v701 = vadd.f32 %v700, 1.0
    %v702 = vrcp.pop %v701
    %v703 = vmul.f32 1.0, %v702
    %v704 = vmul.f32 %v703, 2.0
    %v705 = vsub.f32 %v704, 1.0
    %v707 = vrot.slane %v611, 6
    %v709 = vmul.f32 %v703, %v707
    %711 = vrot.lane.b32.xlu0 %v705, 64
    %v712 = vpop.permute.xlu0 %711
    %v714 = vmul.f32 %v703, %v712
    %716 = vrot.lane.b32.xlu0 %v714, 32
    %v717 = vpop.permute.xlu0 %716
    %v719 = vadd.f32 %v709, %v717
    %v720 = vtanh.pop %v719
    %722 = vrot.lane.b32.xlu0 %v720, 64
    %v723 = vpop.permute.xlu0 %722
    %v725 = vmul.f32 %v703, %v723
    %v727 = vrot.slane %v725, 2
    %728 = vrot.lane.b32.xlu0 %v727, 32
    %v729 = vpop.permute.xlu0 %728
    %v730 = vsel %vm85, %v729, 0
    %732 = vmatprep.subr.mxu0 0.0
    %733 = vmatpush1.msra.mxu0 0.0
    %734 = vmatprep.subr.mxu0 0.0
    %735 = vmatpush1.msra.mxu0 0.0
    %736 = vmatprep.subr.mxu0 0.0
    %737 = vmatpush1.msra.mxu0 0.0
    %738 = vmatprep.subr.mxu0 0.0
    %739 = vmatpush1.msra.mxu0 0.0
    %740 = vmatprep.subr.mxu0 0.0
    %741 = vmatpush1.msra.mxu0 0.0
    %742 = vmatprep.subr.mxu0 0.0
    %743 = vmatpush1.msra.mxu0 0.0
    %744 = vmatprep.subr.mxu0 0.0
    %745 = vmatpush1.msra.mxu0 0.0
    %746 = vmatprep.subr.mxu0 0.0
    %747 = vmatpush1.msra.mxu0 0.0
    %748 = vmatprep.subr.mxu0 0.0
    %749 = vmatpush1.msra.mxu0 0.0
    %750 = vmatprep.subr.mxu0 0.0
    %751 = vmatpush1.msra.mxu0 0.0
    %752 = vmatprep.subr.mxu0 0.0
    %753 = vmatpush1.msra.mxu0 0.0
    %754 = vmatprep.subr.mxu0 0.0
    %755 = vmatpush1.msra.mxu0 0.0
    %756 = vmatprep.subr.mxu0 0.0
    %757 = vmatpush1.msra.mxu0 %v49
    %758 = vmatprep.subr.mxu0 0.0
    %759 = vmatpush1.msra.mxu0 %v48
    %760 = vmatprep.subr.mxu0 0.0
    %761 = vmatpush1.msra.mxu0 %v47
    %762 = vmatprep.subr.mxu0 0.0
    %763 = vmatpush1.msra.mxu0 %v46
    %764 = vmatprep.subr.mxu0 0.0
    %765 = vmatpush2.msra.mxu0 0.0
    %766 = vmatprep.subr.mxu0 0.0
    %767 = vmatpush2.msra.mxu0 0.0
    %768 = vmatprep.subr.mxu0 0.0
    %769 = vmatpush2.msra.mxu0 0.0
    %770 = vmatprep.subr.mxu0 0.0
    %771 = vmatpush2.msra.mxu0 0.0
    %772 = vmatprep.subr.mxu0 0.0
    %773 = vmatpush2.msra.mxu0 0.0
    %774 = vmatprep.subr.mxu0 0.0
    %775 = vmatpush2.msra.mxu0 0.0
    %776 = vmatprep.subr.mxu0 0.0
    %777 = vmatpush2.msra.mxu0 0.0
    %778 = vmatprep.subr.mxu0 0.0
    %779 = vmatpush2.msra.mxu0 0.0
    %780 = vmatprep.subr.mxu0 0.0
    %781 = vmatpush2.msra.mxu0 0.0
    %782 = vmatprep.subr.mxu0 0.0
    %783 = vmatpush2.msra.mxu0 0.0
    %784 = vmatprep.subr.mxu0 0.0
    %785 = vmatpush2.msra.mxu0 0.0
    %786 = vmatprep.subr.mxu0 0.0
    %787 = vmatpush2.msra.mxu0 0.0
    %788 = vmatprep.subr.mxu0 0.0
    %789 = vmatpush2.msra.mxu0 0.0
    %790 = vmatprep.subr.mxu0 0.0
    %791 = vmatpush2.msra.mxu0 0.0
    %792 = vmatprep.subr.mxu0 0.0
    %793 = vmatpush2.msra.mxu0 0.0
    %794 = vmatprep.subr.mxu0 0.0
    %795 = vmatpush2.msra.mxu0 0.0
    %796 = vmatprep.mubr.f32.mxu0 0.0
    %797 = vmatmul.mubr.f32.gmra.mxu0 %v730
    %v798 = vpop.f32.mrf.mxu0
    %v799 = vadd.f32 0.0, %v798
    %v800 = vpop.f32.mrf.mxu0
    %801 = vdwg.mxu0
    %v803 = vrot.slane %v799, 4
    %v805 = vadd.f32 %v78, %v803
    %v806 = vmul.f32 %v805, %v84
    %v807 = vxor.u32 %v806, 2147483648
    %v808 = vmul.f32 %v807, 1.442695
    %v809 = vpow.pop %v808
    %v810 = vadd.f32 %v809, 1.0
    %v811 = vrcp.pop %v810
    %v812 = vmul.f32 1.0, %v811
    %v813 = vmul.f32 %v812, 2.0
    %v814 = vsub.f32 %v813, 1.0
    %v816 = vrot.slane %v719, 6
    %v818 = vmul.f32 %v812, %v816
    %820 = vrot.lane.b32.xlu0 %v814, 64
    %v821 = vpop.permute.xlu0 %820
    %v823 = vmul.f32 %v812, %v821
    %825 = vrot.lane.b32.xlu0 %v823, 32
    %v826 = vpop.permute.xlu0 %825
    %v828 = vadd.f32 %v818, %v826
    %v829 = vtanh.pop %v828
    %831 = vrot.lane.b32.xlu0 %v829, 64
    %v832 = vpop.permute.xlu0 %831
    %v834 = vmul.f32 %v812, %v832
    %v836 = vrot.slane %v834, 4
    %837 = vrot.lane.b32.xlu0 %v836, 32
    %v838 = vpop.permute.xlu0 %837
    %v839 = vsel %vm85, %v838, 0
    %841 = vmatprep.subr.mxu0 0.0
    %842 = vmatpush1.msra.mxu0 0.0
    %843 = vmatprep.subr.mxu0 0.0
    %844 = vmatpush1.msra.mxu0 0.0
    %845 = vmatprep.subr.mxu0 0.0
    %846 = vmatpush1.msra.mxu0 0.0
    %847 = vmatprep.subr.mxu0 0.0
    %848 = vmatpush1.msra.mxu0 0.0
    %849 = vmatprep.subr.mxu0 0.0
    %850 = vmatpush1.msra.mxu0 0.0
    %851 = vmatprep.subr.mxu0 0.0
    %852 = vmatpush1.msra.mxu0 0.0
    %853 = vmatprep.subr.mxu0 0.0
    %854 = vmatpush1.msra.mxu0 0.0
    %855 = vmatprep.subr.mxu0 0.0
    %856 = vmatpush1.msra.mxu0 0.0
    %857 = vmatprep.subr.mxu0 0.0
    %858 = vmatpush1.msra.mxu0 0.0
    %859 = vmatprep.subr.mxu0 0.0
    %860 = vmatpush1.msra.mxu0 0.0
    %861 = vmatprep.subr.mxu0 0.0
    %862 = vmatpush1.msra.mxu0 0.0
    %863 = vmatprep.subr.mxu0 0.0
    %864 = vmatpush1.msra.mxu0 0.0
    %865 = vmatprep.subr.mxu0 0.0
    %866 = vmatpush1.msra.mxu0 %v49
    %867 = vmatprep.subr.mxu0 0.0
    %868 = vmatpush1.msra.mxu0 %v48
    %869 = vmatprep.subr.mxu0 0.0
    %870 = vmatpush1.msra.mxu0 %v47
    %871 = vmatprep.subr.mxu0 0.0
    %872 = vmatpush1.msra.mxu0 %v46
    %873 = vmatprep.subr.mxu0 0.0
    %874 = vmatpush2.msra.mxu0 0.0
    %875 = vmatprep.subr.mxu0 0.0
    %876 = vmatpush2.msra.mxu0 0.0
    %877 = vmatprep.subr.mxu0 0.0
    %878 = vmatpush2.msra.mxu0 0.0
    %879 = vmatprep.subr.mxu0 0.0
    %880 = vmatpush2.msra.mxu0 0.0
    %881 = vmatprep.subr.mxu0 0.0
    %882 = vmatpush2.msra.mxu0 0.0
    %883 = vmatprep.subr.mxu0 0.0
    %884 = vmatpush2.msra.mxu0 0.0
    %885 = vmatprep.subr.mxu0 0.0
    %886 = vmatpush2.msra.mxu0 0.0
    %887 = vmatprep.subr.mxu0 0.0
    %888 = vmatpush2.msra.mxu0 0.0
    %889 = vmatprep.subr.mxu0 0.0
    %890 = vmatpush2.msra.mxu0 0.0
    %891 = vmatprep.subr.mxu0 0.0
    %892 = vmatpush2.msra.mxu0 0.0
    %893 = vmatprep.subr.mxu0 0.0
    %894 = vmatpush2.msra.mxu0 0.0
    %895 = vmatprep.subr.mxu0 0.0
    %896 = vmatpush2.msra.mxu0 0.0
    %897 = vmatprep.subr.mxu0 0.0
    %898 = vmatpush2.msra.mxu0 0.0
    %899 = vmatprep.subr.mxu0 0.0
    %900 = vmatpush2.msra.mxu0 0.0
    %901 = vmatprep.subr.mxu0 0.0
    %902 = vmatpush2.msra.mxu0 0.0
    %903 = vmatprep.subr.mxu0 0.0
    %904 = vmatpush2.msra.mxu0 0.0
    %905 = vmatprep.mubr.f32.mxu0 0.0
    %906 = vmatmul.mubr.f32.gmra.mxu0 %v839
    %v907 = vpop.f32.mrf.mxu0
    %v908 = vadd.f32 0.0, %v907
    %v909 = vpop.f32.mrf.mxu0
    %910 = vdwg.mxu0
    %v912 = vrot.slane %v908, 2
    %v914 = vadd.f32 %v78, %v912
    %v915 = vmul.f32 %v914, %v84
    %v916 = vxor.u32 %v915, 2147483648
    %v917 = vmul.f32 %v916, 1.442695
    %v918 = vpow.pop %v917
    %v919 = vadd.f32 %v918, 1.0
    %v920 = vrcp.pop %v919
    %v921 = vmul.f32 1.0, %v920
    %v922 = vmul.f32 %v921, 2.0
    %v923 = vsub.f32 %v922, 1.0
    %v925 = vrot.slane %v828, 6
    %v927 = vmul.f32 %v921, %v925
    %929 = vrot.lane.b32.xlu0 %v923, 64
    %v930 = vpop.permute.xlu0 %929
    %v932 = vmul.f32 %v921, %v930
    %934 = vrot.lane.b32.xlu0 %v932, 32
    %v935 = vpop.permute.xlu0 %934
    %v937 = vadd.f32 %v927, %v935
    %v938 = vtanh.pop %v937
    %940 = vrot.lane.b32.xlu0 %v938, 64
    %v941 = vpop.permute.xlu0 %940
    %v943 = vmul.f32 %v921, %v941
    %v944 = vld [vmem:[#allocation3] sm:$0xff]
    %v945 = vld [vmem:[#allocation3 + $0x8] sm:$0xff]
    %v946 = vld [vmem:[#allocation3 + $0x10] sm:$0xff]
    %v947 = vld [vmem:[#allocation3 + $0x18] sm:$0xff]
    %v948 = vld [vmem:[%s5] sm:$0x1]
    %v950 = vlaneseq
    %v951 = vshrl.u32 %v950, 7
    %v952 = vsub.s32 0, %v951
    %v953 = vrot.slane %v948, %v952
    %v956 = vrot.slane %v943, 6
    %957 = vrot.lane.b32.xlu0 %v956, 32
    %v958 = vpop.permute.xlu0 %957
    %v959 = vsel %vm85, %v958, 0
    %961 = vmatprep.subr.mxu0 0.0
    %962 = vmatpush1.msra.mxu0 0.0
    %963 = vmatprep.subr.mxu0 0.0
    %964 = vmatpush1.msra.mxu0 0.0
    %965 = vmatprep.subr.mxu0 0.0
    %966 = vmatpush1.msra.mxu0 0.0
    %967 = vmatprep.subr.mxu0 0.0
    %968 = vmatpush1.msra.mxu0 0.0
    %969 = vmatprep.subr.mxu0 0.0
    %970 = vmatpush1.msra.mxu0 0.0
    %971 = vmatprep.subr.mxu0 0.0
    %972 = vmatpush1.msra.mxu0 0.0
    %973 = vmatprep.subr.mxu0 0.0
    %974 = vmatpush1.msra.mxu0 0.0
    %975 = vmatprep.subr.mxu0 0.0
    %976 = vmatpush1.msra.mxu0 0.0
    %977 = vmatprep.subr.mxu0 0.0
    %978 = vmatpush1.msra.mxu0 0.0
    %979 = vmatprep.subr.mxu0 0.0
    %980 = vmatpush1.msra.mxu0 0.0
    %981 = vmatprep.subr.mxu0 0.0
    %982 = vmatpush1.msra.mxu0 0.0
    %983 = vmatprep.subr.mxu0 0.0
    %984 = vmatpush1.msra.mxu0 0.0
    %985 = vmatprep.subr.mxu0 0.0
    %986 = vmatpush1.msra.mxu0 %v947
    %987 = vmatprep.subr.mxu0 0.0
    %988 = vmatpush1.msra.mxu0 %v946
    %989 = vmatprep.subr.mxu0 0.0
    %990 = vmatpush1.msra.mxu0 %v945
    %991 = vmatprep.subr.mxu0 0.0
    %992 = vmatpush1.msra.mxu0 %v944
    %993 = vmatprep.subr.mxu0 0.0
    %994 = vmatpush2.msra.mxu0 0.0
    %995 = vmatprep.subr.mxu0 0.0
    %996 = vmatpush2.msra.mxu0 0.0
    %997 = vmatprep.subr.mxu0 0.0
    %998 = vmatpush2.msra.mxu0 0.0
    %999 = vmatprep.subr.mxu0 0.0
    %1000 = vmatpush2.msra.mxu0 0.0
    %1001 = vmatprep.subr.mxu0 0.0
    %1002 = vmatpush2.msra.mxu0 0.0
    %1003 = vmatprep.subr.mxu0 0.0
    %1004 = vmatpush2.msra.mxu0 0.0
    %1005 = vmatprep.subr.mxu0 0.0
    %1006 = vmatpush2.msra.mxu0 0.0
    %1007 = vmatprep.subr.mxu0 0.0
    %1008 = vmatpush2.msra.mxu0 0.0
    %1009 = vmatprep.subr.mxu0 0.0
    %1010 = vmatpush2.msra.mxu0 0.0
    %1011 = vmatprep.subr.mxu0 0.0
    %1012 = vmatpush2.msra.mxu0 0.0
    %1013 = vmatprep.subr.mxu0 0.0
    %1014 = vmatpush2.msra.mxu0 0.0
    %1015 = vmatprep.subr.mxu0 0.0
    %1016 = vmatpush2.msra.mxu0 0.0
    %1017 = vmatprep.subr.mxu0 0.0
    %1018 = vmatpush2.msra.mxu0 0.0
    %1019 = vmatprep.subr.mxu0 0.0
    %1020 = vmatpush2.msra.mxu0 0.0
    %1021 = vmatprep.subr.mxu0 0.0
    %1022 = vmatpush2.msra.mxu0 0.0
    %1023 = vmatprep.subr.mxu0 0.0
    %1024 = vmatpush2.msra.mxu0 0.0
    %1025 = vmatprep.mubr.f32.mxu0 0.0
    %1026 = vmatmul.mubr.f32.gmra.mxu0 %v959
    %v1027 = vpop.f32.mrf.mxu0
    %v1028 = vadd.f32 %v953, %v1027
    %v1029 = vpop.f32.mrf.mxu0
    %1030 = vdwg.mxu0
    %v1031 = vmax.f32 %v1028, 0.0
    %v1032 = vld [vmem:[%s6] sm:$0x1]
    %v1034 = vlaneseq
    %v1035 = vshrl.u32 %v1034, 7
    %v1036 = vsub.s32 0, %v1035
    %v1037 = vrot.slane %v1032, %v1036
    %v1039 = vmul.f32 %v1031, %v1037
    %vm1040 = vcmask 254976
    %v1041 = vsel %vm1040, %v1039, 0.0
    %1042 = vadd.xlane.f32.xlu0 %v1041
    %v1043 = vpop.xlane.xlu0 %1042
    %v1044 = vld [vmem:[#allocation2] sm:$0x1]
    %v1046 = vlaneseq
    %v1047 = vshrl.u32 %v1046, 7
    %v1048 = vsub.s32 0, %v1047
    %v1049 = vrot.slane %v1044, %v1048
    %v1051 = vadd.f32 %v1043, %v1049
    %v1052 = vxor.u32 %v1051, 2147483648
    %v1053 = vmul.f32 %v1052, 1.442695
    %v1054 = vpow.pop %v1053
    %v1055 = vadd.f32 %v1054, 1.0
    %v1056 = vrcp.pop %v1055
    %v1057 = vmul.f32 1.0, %v1056
    %vm1058 = vcmask 1024
    %1059 = vst.msk [vmem:[%s8] sm:$0x3] %vm1058, %v1057
    // Predicated region
    $region38: #{lstm_forward.1} parent=1 // pred_check
      _
    $region39: #{lstm_forward.1} parent=1 // pred_check_branch
      %1061 = sbr.rel (0) target = $region41
    $region40: #{lstm_forward.1} parent=1 // pred_region
      _
    $region41: #{lstm_forward.1} parent=1 // pred_fallthru
      _
    // Predicated region
    $region42: #{lstm_forward.1} parent=1 // pred_check
      _
    $region43: #{lstm_forward.1} parent=1 // pred_check_branch
      %1063 = sbr.rel (0) target = $region45
    $region44: #{lstm_forward.1} parent=1 // pred_region
      _
    $region45: #{lstm_forward.1} parent=1 // pred_fallthru
      _
    %1064 = vsyncpa [#allocation4], 1

</llo_original>
